<compile_context>
chip_gen: v5e
topology: v5e:2x2
jax: 0.10.0
libtpu: 0.0.40
codegen_flags: <defaults>
</compile_context>

<pallas_src>
import functools

import jax
import jax.numpy as jnp
from jax.experimental import pallas as pl
from jax.experimental.pallas import tpu as pltpu


def _round_up(x, m):
    return ((x + m - 1) // m) * m


# ----------------------------------------------------------------------------
# Pallas kernels (channel-major: last dim = spatial columns, lane axis)
# ----------------------------------------------------------------------------
def _depthhist_head_kernel(dec_ref, hist_ref, w_ref, b_ref, depth_ref):
    """Non-simple mode: conv1x1 + ReLU, multiply by histogram, sum over bins.

    dec_ref  : (1, 128, TN)   decoded features (channel-major columns)
    hist_ref : (1, BINS, TN)  histogram values
    w_ref    : (BINS, 128)    1x1-conv weight (native PyTorch [out, in] layout)
    b_ref    : (BINS, 1)      1x1-conv bias
    depth_ref: (1, 1, TN)     output depth (== cumsum over bins [..., -1])
    """
    dec = dec_ref[0]                                     # (128, TN)
    logits = jnp.dot(w_ref[...], dec,
                     preferred_element_type=jnp.float32)  # (BINS, TN) on MXU
    act = jnp.maximum(logits + b_ref[...], 0.0)           # ReLU, full-lane VPU
    prod = act * hist_ref[0]                              # (BINS, TN)
    depth_ref[0] = jnp.sum(prod, axis=0, keepdims=True)   # (1, TN) lane-dense


def _simple_head_kernel(dec_ref, w_ref, b_ref, out_ref):
    """Simple mode: conv1x1(128 -> 1) + ReLU.

    dec_ref: (1, 128, TN)   w_ref: (1, 128)   b_ref: (1, 1)   out_ref: (1, 1, TN)
    """
    logits = jnp.dot(w_ref[...], dec_ref[0],
                     preferred_element_type=jnp.float32)   # (1, TN)
    out_ref[0] = jnp.maximum(logits + b_ref[...], 0.0)     # lane-dense store


# ----------------------------------------------------------------------------
# Wrappers
# ----------------------------------------------------------------------------
@functools.partial(jax.jit, static_argnames=("tile_n",))
def depthhist_compute_output(decoded_nchw, histogram_nchw, w_conv, b_conv,
                             tile_n=2048):
    """Non-simple DepthHist._compute_output.

    decoded_nchw   : [B, 128, H, W]   decoder output
    histogram_nchw : [B, BINS, H, W]  HistLayer output
    w_conv         : [BINS, 128]      Conv2d(128, BINS, 1) weight (kernel dims squeezed)
    b_conv         : [BINS]           Conv2d bias
    returns (depth [B, 1, H, W], histogram [B, BINS, H, W])
    """
    b, c_in, h, w = decoded_nchw.shape
    bins = histogram_nchw.shape[1]
    hw = h * w

    # Tile over the spatial (lane) axis; clamp to the image, keep multiple of 128.
    tn = min(_round_up(tile_n, 128), _round_up(hw, 128))
    grid = (b, pl.cdiv(hw, tn))

    dec = decoded_nchw.reshape(b, c_in, hw)        # free reshape (no transpose)
    hist = histogram_nchw.reshape(b, bins, hw)     # free reshape
    b_col = b_conv.reshape(bins, 1)

    itemsize = 4
    cost = pl.CostEstimate(
        flops=2 * b * hw * c_in * bins,
        transcendentals=0,
        bytes_accessed=itemsize * (b * hw * (c_in + bins + 1)
                                   + bins * c_in + bins),
    )

    depth_flat = pl.pallas_call(
        _depthhist_head_kernel,
        out_shape=jax.ShapeDtypeStruct((b, 1, hw), jnp.float32),
        grid_spec=pltpu.PrefetchScalarGridSpec(
            num_scalar_prefetch=0,
            grid=grid,
            in_specs=[
                pl.BlockSpec((1, c_in, tn), lambda bi, i: (bi, 0, i)),
                pl.BlockSpec((1, bins, tn), lambda bi, i: (bi, 0, i)),
                pl.BlockSpec((bins, c_in), lambda bi, i: (0, 0)),
                pl.BlockSpec((bins, 1), lambda bi, i: (0, 0)),
            ],
            out_specs=pl.BlockSpec((1, 1, tn), lambda bi, i: (bi, 0, i)),
        ),
        compiler_params=pltpu.CompilerParams(
            dimension_semantics=("parallel", "parallel")),
        cost_estimate=cost,
    )(dec, hist, w_conv, b_col)

    depth = depth_flat.reshape(b, 1, h, w)
    return depth, histogram_nchw


@functools.partial(jax.jit, static_argnames=("tile_n",))
def depthhist_compute_output_simple(decoded_nchw, w_conv, b_conv, tile_n=2048):
    """Simple DepthHist._compute_output: ReLU(Conv2d(128, 1, 1)(decoded))."""
    b, c_in, h, w = decoded_nchw.shape
    hw = h * w

    tn = min(_round_up(tile_n, 128), _round_up(hw, 128))
    grid = (b, pl.cdiv(hw, tn))

    dec = decoded_nchw.reshape(b, c_in, hw)
    w_row = w_conv.reshape(1, c_in)
    b_mat = b_conv.reshape(1, 1)

    itemsize = 4
    cost = pl.CostEstimate(
        flops=2 * b * hw * c_in,
        transcendentals=0,
        bytes_accessed=itemsize * (b * hw * (c_in + 1) + c_in + 1),
    )

    out_flat = pl.pallas_call(
        _simple_head_kernel,
        out_shape=jax.ShapeDtypeStruct((b, 1, hw), jnp.float32),
        grid_spec=pltpu.PrefetchScalarGridSpec(
            num_scalar_prefetch=0,
            grid=grid,
            in_specs=[
                pl.BlockSpec((1, c_in, tn), lambda bi, i: (bi, 0, i)),
                pl.BlockSpec((1, c_in), lambda bi, i: (0, 0)),
                pl.BlockSpec((1, 1), lambda bi, i: (0, 0)),
            ],
            out_specs=pl.BlockSpec((1, 1, tn), lambda bi, i: (bi, 0, i)),
        ),
        compiler_params=pltpu.CompilerParams(
            dimension_semantics=("parallel", "parallel")),
        cost_estimate=cost,
    )(dec, w_row, b_mat)

    return out_flat.reshape(b, 1, h, w)


# ----------------------------------------------------------------------------
# Pure-JAX reference (mirrors PyTorch semantics)
# ----------------------------------------------------------------------------
def _ref_compute_output(decoded, histogram, w_conv, b_conv):
    conv = jnp.einsum("bchw,oc->bohw", decoded, w_conv) + b_conv[None, :, None, None]
    conv = jnp.maximum(conv, 0.0)
    depth = jnp.cumsum(conv * histogram, axis=1)[:, -1:, ...]
    return depth


def _ref_simple(decoded, w_conv, b_conv):
    conv = jnp.einsum("bchw,oc->bohw", decoded, w_conv) + b_conv[None, :, None, None]
    return jnp.maximum(conv, 0.0)


# ----------------------------------------------------------------------------
# Main
# ----------------------------------------------------------------------------
if __name__ == "__main__":
    B, C_DEC, H, W = 2, 128, 16, 16      # decoder output is 128 channels (num_classes=128)
    BINS = 8                             # args.bins

    key = jax.random.PRNGKey(0)
    k_dec, k_hist, k_w, k_b, k_ws, k_bs = jax.random.split(key, 6)

    # Synthetic decoder / HistLayer outputs (stand-ins for the external backbones).
    decoded = jax.random.normal(k_dec, (B, C_DEC, H, W), dtype=jnp.float32)
    hist_logits = jax.random.normal(k_hist, (B, BINS, H, W), dtype=jnp.float32)
    histogram = jax.nn.softmax(hist_logits, axis=1)        # sums to 1 over bins

    # Deterministic conv_out parameters (Conv2d(128, bins, 1) and Conv2d(128, 1, 1)).
    w_bins = jax.random.normal(k_w, (BINS, C_DEC), dtype=jnp.float32) * 0.05
    b_bins = jax.random.normal(k_b, (BINS,), dtype=jnp.float32) * 0.05
    w_one = jax.random.normal(k_ws, (1, C_DEC), dtype=jnp.float32) * 0.05
    b_one = jax.random.normal(k_bs, (1,), dtype=jnp.float32) * 0.05

    # Non-simple mode: (depth, histogram)
    depth, hist_out = depthhist_compute_output(decoded, histogram, w_bins, b_bins)
    depth = jax.block_until_ready(depth)

    # Simple mode: unet_out
    unet_out = jax.block_until_ready(
        depthhist_compute_output_simple(decoded, w_one, b_one))

    # Correctness vs. pure-JAX reference of the PyTorch math.
    depth_ref = _ref_compute_output(decoded, histogram, w_bins, b_bins)
    unet_ref = _ref_simple(decoded, w_one, b_one)

    assert depth.shape == (B, 1, H, W)
    assert hist_out.shape == (B, BINS, H, W)
    assert unet_out.shape == (B, 1, H, W)
    assert jnp.allclose(depth, depth_ref, atol=1e-4, rtol=1e-4)
    assert jnp.allclose(unet_out, unet_ref, atol=1e-4, rtol=1e-4)

    print("KERNEL_OK")
</pallas_src>

<mosaic_0001>
module attributes {stable_mosaic.version = 11 : i64} {
  func.func @_depthhist_head_kernel(%arg0: i32, %arg1: i32, %arg2: memref<1x128x256xf32, #tpu.memory_space<vmem>>, %arg3: memref<1x8x256xf32, #tpu.memory_space<vmem>>, %arg4: memref<8x128xf32, #tpu.memory_space<vmem>>, %arg5: memref<8x1xf32, #tpu.memory_space<vmem>>, %arg6: memref<1x1x256xf32, #tpu.memory_space<vmem>>) attributes {dimension_semantics = [#tpu.dimension_semantics<parallel>, #tpu.dimension_semantics<parallel>], iteration_bounds = array<i64: 2, 1>, scalar_prefetch = 0 : i64, scratch_operands = 0 : i64, tpu.core_type = #tpu.core_type<tc>, window_params = [{transform_indices = @transform_0, window_bounds = array<i64: 1, 128, 256>}, {transform_indices = @transform_1, window_bounds = array<i64: 1, 8, 256>}, {pipeline_mode = #tpu.pipeline_mode<synchronous>, transform_indices = @transform_2, window_bounds = array<i64: 8, 128>}, {pipeline_mode = #tpu.pipeline_mode<synchronous>, transform_indices = @transform_3, window_bounds = array<i64: 8, 1>}, {transform_indices = @transform_4, window_bounds = array<i64: 1, 1, 256>}]} {
    %c0 = arith.constant 0 : index
    %c0_0 = arith.constant 0 : index
    %c0_1 = arith.constant 0 : index
    %0 = vector.load %arg2[%c0, %c0_0, %c0_1] : memref<1x128x256xf32, #tpu.memory_space<vmem>>, vector<1x128x256xf32>
    %1 = vector.shape_cast %0 : vector<1x128x256xf32> to vector<128x256xf32>
    %c0_2 = arith.constant 0 : index
    %c0_3 = arith.constant 0 : index
    %2 = vector.load %arg4[%c0_2, %c0_3] : memref<8x128xf32, #tpu.memory_space<vmem>>, vector<8x128xf32>
    %cst = arith.constant dense<0.000000e+00> : vector<8x256xf32>
    %3 = tpu.matmul %2, %1, %cst {dimension_numbers = #tpu.dot_dimension_numbers<[1], [0], [0], [1], [0, 0, 1, 1], [], []>} : vector<8x128xf32>, vector<128x256xf32>, vector<8x256xf32> -> vector<8x256xf32>
    %c0_4 = arith.constant 0 : index
    %c0_5 = arith.constant 0 : index
    %4 = vector.load %arg5[%c0_4, %c0_5] : memref<8x1xf32, #tpu.memory_space<vmem>>, vector<8x1xf32>
    %5 = vector.broadcast %4 : vector<8x1xf32> to vector<8x256xf32>
    %6 = arith.addf %3, %5 : vector<8x256xf32>
    %cst_6 = arith.constant 0.000000e+00 : f32
    %7 = vector.broadcast %cst_6 : f32 to vector<8x256xf32>
    %8 = arith.maximumf %6, %7 : vector<8x256xf32>
    %c0_7 = arith.constant 0 : index
    %c0_8 = arith.constant 0 : index
    %c0_9 = arith.constant 0 : index
    %9 = vector.load %arg3[%c0_7, %c0_8, %c0_9] : memref<1x8x256xf32, #tpu.memory_space<vmem>>, vector<1x8x256xf32>
    %10 = vector.shape_cast %9 : vector<1x8x256xf32> to vector<8x256xf32>
    %11 = arith.mulf %8, %10 : vector<8x256xf32>
    %cst_10 = arith.constant dense<0.000000e+00> : vector<256xf32>
    %12 = vector.multi_reduction <add>, %11, %cst_10 [0] : vector<8x256xf32> to vector<256xf32>
    %13 = vector.shape_cast %12 : vector<256xf32> to vector<1x256xf32>
    %c0_11 = arith.constant 0 : index
    %c0_12 = arith.constant 0 : index
    %c0_13 = arith.constant 0 : index
    %14 = vector.load %arg6[%c0_11, %c0_12, %c0_13] : memref<1x1x256xf32, #tpu.memory_space<vmem>>, vector<1x1x256xf32>
    %15 = vector.shape_cast %14 : vector<1x1x256xf32> to vector<1x256xf32>
    %16 = vector.shape_cast %13 : vector<1x256xf32> to vector<1x1x256xf32>
    tpu.vector_store %arg6[%c0_11, %c0_12, %c0_13], %16 {strides = array<i32>} : memref<1x1x256xf32, #tpu.memory_space<vmem>>, vector<1x1x256xf32>,
    return
  }
  func.func @transform_0(%arg0: i32, %arg1: i32) -> (i32, i32, i32) {
    %c0_i32 = arith.constant 0 : i32
    %c0_i32_0 = arith.constant 0 : i32
    return %arg0, %c0_i32, %arg1 : i32, i32, i32
  }
  func.func @transform_1(%arg0: i32, %arg1: i32) -> (i32, i32, i32) {
    %c0_i32 = arith.constant 0 : i32
    %c0_i32_0 = arith.constant 0 : i32
    return %arg0, %c0_i32, %arg1 : i32, i32, i32
  }
  func.func @transform_2(%arg0: i32, %arg1: i32) -> (i32, i32) {
    %c0_i32 = arith.constant 0 : i32
    %c0_i32_0 = arith.constant 0 : i32
    %c0_i32_1 = arith.constant 0 : i32
    return %c0_i32, %c0_i32_0 : i32, i32
  }
  func.func @transform_3(%arg0: i32, %arg1: i32) -> (i32, i32) {
    %c0_i32 = arith.constant 0 : i32
    %c0_i32_0 = arith.constant 0 : i32
    %c0_i32_1 = arith.constant 0 : i32
    return %c0_i32, %c0_i32_0 : i32, i32
  }
  func.func @transform_4(%arg0: i32, %arg1: i32) -> (i32, i32, i32) {
    %c0_i32 = arith.constant 0 : i32
    %c0_i32_0 = arith.constant 0 : i32
    return %arg0, %c0_i32, %arg1 : i32, i32, i32
  }
}

</mosaic_0001>

<llo_original>
// kernel: depthhist_compute_output.1
$region0: #{depthhist_compute_output.1}
  #allocation0 [shape = 'u32[]', space=smem, size = 0x4, offset = 0x4, fixed_abs, tag = 'smem constant byte address 0x4 - core index']
  #allocation1 [shape = 'u32[72,128]{1,0:T(1,128)}', space=vmem, size = 0x9000, scoped, tag = 'internal scratch']
  %s0 = inlined_call_operand.vmem [shape: f32[2,128,256], index: 0, kind: input, shape index: {}]
  %s1 = inlined_call_operand.vmem [shape: f32[2,8,256], index: 1, kind: input, shape index: {}]
  %s2 = inlined_call_operand.vmem [shape: f32[8,128], index: 2, kind: input, shape index: {}]
  %s3 = inlined_call_operand.vmem [shape: f32[8,1], index: 3, kind: input, shape index: {}]
  %s4 = inlined_call_operand.vmem [shape: f32[2,1,256], index: 4, kind: output, shape index: {}]
  %s5 = sld [smem:[#allocation0]]
  $region49: #{depthhist_compute_output.1} parent=0
    _
  %s7 = ssub.s32 1, %s5
  %s8 = scalar_select 0, %s7, %s5
  loop: start=0, step=1, limit=4
  $region2: #{depthhist_compute_output.1} parent=0 // loop_pre_header
    _
  $region3: #{depthhist_compute_output.1} parent=0 // loop_header
    %s10 = sphi 0, %s14
    %p11 = scmp.ge.s32.totalorder %s10, 4
    %s17 = sphi 0, %s29
    %s18 = sphi 0, %s25
    %s19 = sphi 0, %s17
    %s20 = sphi 0, %s18
    %s21 = sphi 0, %s19
    %s22 = sphi 0, %s20
    %s34 = sphi 0, %s36
    %s37 = sphi 0, %s34
    %s38 = sphi 0, %s37
    %s54 = sphi 0, %s38
    %s62 = sphi 0, %s64
    %s65 = sphi 0, %s62
    %s66 = sphi 0, %s65
    %s82 = sphi 0, %s66
    %s86 = sphi 0, %s86
    %s88 = sphi 0, %s86
    %s89 = sphi 0, %s88
    %s103 = sphi 0, %s89
    %s107 = sphi 0, %s107
    %s109 = sphi 0, %s107
    %s110 = sphi 0, %s109
    %s124 = sphi 0, %s110
    %s132 = sphi 0, %s134
    %s135 = sphi 0, %s132
    %s136 = sphi 0, %s135
    %s152 = sphi 0, %s136
  $region4: #{depthhist_compute_output.1} parent=0 // loop_header_branch
    %13 = sbr.rel (%p11) target = $region8
  $region5: #{depthhist_compute_output.1} parent=0 // loop_body
    %s15 = ssub.s32 %s10, 1
    %s16 = ssub.s32 %s10, 2
    %s23 = sadd.s32 1, %s18
    %p24 = scmp.ge.s32.totalorder %s23, 1
    %s25 = scalar_select %p24, 0, %s23
    %s26 = sadd.s32 1, %s17
    %s27 = scalar_select %p24, %s26, %s17
    %p28 = scmp.ge.s32.totalorder %s27, 2
    %s29 = scalar_select %p28, 0, %s27
    %s30 = ssub.s32 %s17, %s29
    %s31 = ssub.s32 %s18, %s25
    %s32 = sor.u32 %s30, %s31
    %p33 = scmp.eq.s32.totalorder %s32, 0
    %s35 = sadd.s32 %s34, 1
    %s36 = scalar_select %p33, %s34, %s35
    %p39 = pneg %p33
    %p40 = scmp.eq.s32.totalorder %s10, 1
    %p41 = por %p39, %p40
    %p42 = scmp.ne.s32.totalorder %s34, %s37
    %p43 = scmp.eq.s32.totalorder %s10, 0
    %p44 = por %p42, %p43
    %p45 = scmp.ne.s32.totalorder %s34, %s37
    %p46 = scmp.eq.s32.totalorder %s15, 1
    %p47 = por %p45, %p46
    %p48 = scmp.ne.s32.totalorder %s37, %s38
    %p49 = scmp.eq.s32.totalorder %s15, 0
    %p50 = por %p48, %p49
    %p51 = scmp.ne.s32.totalorder %s37, %s38
    %p52 = scmp.eq.s32.totalorder %s16, 1
    %p53 = por %p51, %p52
    %p55 = scmp.ne.s32.totalorder %s38, %s54
    %p56 = scmp.eq.s32.totalorder %s16, 0
    %p57 = por %p55, %p56
    %s58 = ssub.s32 %s17, %s29
    %s59 = ssub.s32 %s18, %s25
    %s60 = sor.u32 %s58, %s59
    %p61 = scmp.eq.s32.totalorder %s60, 0
    %s63 = sadd.s32 %s62, 1
    %s64 = scalar_select %p61, %s62, %s63
    %p67 = pneg %p61
    %p68 = scmp.eq.s32.totalorder %s10, 1
    %p69 = por %p67, %p68
    %p70 = scmp.ne.s32.totalorder %s62, %s65
    %p71 = scmp.eq.s32.totalorder %s10, 0
    %p72 = por %p70, %p71
    %p73 = scmp.ne.s32.totalorder %s62, %s65
    %p74 = scmp.eq.s32.totalorder %s15, 1
    %p75 = por %p73, %p74
    %p76 = scmp.ne.s32.totalorder %s65, %s66
    %p77 = scmp.eq.s32.totalorder %s15, 0
    %p78 = por %p76, %p77
    %p79 = scmp.ne.s32.totalorder %s65, %s66
    %p80 = scmp.eq.s32.totalorder %s16, 1
    %p81 = por %p79, %p80
    %p83 = scmp.ne.s32.totalorder %s66, %s82
    %p84 = scmp.eq.s32.totalorder %s16, 0
    %p85 = por %p83, %p84
    %s87 = sadd.s32 %s86, 1
    %p90 = scmp.eq.s32.totalorder %s10, 1
    %p91 = scmp.ne.s32.totalorder %s86, %s88
    %p92 = scmp.eq.s32.totalorder %s10, 0
    %p93 = por %p91, %p92
    %p94 = scmp.ne.s32.totalorder %s86, %s88
    %p95 = scmp.eq.s32.totalorder %s15, 1
    %p96 = por %p94, %p95
    %p97 = scmp.ne.s32.totalorder %s88, %s89
    %p98 = scmp.eq.s32.totalorder %s15, 0
    %p99 = por %p97, %p98
    %p100 = scmp.ne.s32.totalorder %s88, %s89
    %p101 = scmp.eq.s32.totalorder %s16, 1
    %p102 = por %p100, %p101
    %p104 = scmp.ne.s32.totalorder %s89, %s103
    %p105 = scmp.eq.s32.totalorder %s16, 0
    %p106 = por %p104, %p105
    %s108 = sadd.s32 %s107, 1
    %p111 = scmp.eq.s32.totalorder %s10, 1
    %p112 = scmp.ne.s32.totalorder %s107, %s109
    %p113 = scmp.eq.s32.totalorder %s10, 0
    %p114 = por %p112, %p113
    %p115 = scmp.ne.s32.totalorder %s107, %s109
    %p116 = scmp.eq.s32.totalorder %s15, 1
    %p117 = por %p115, %p116
    %p118 = scmp.ne.s32.totalorder %s109, %s110
    %p119 = scmp.eq.s32.totalorder %s15, 0
    %p120 = por %p118, %p119
    %p121 = scmp.ne.s32.totalorder %s109, %s110
    %p122 = scmp.eq.s32.totalorder %s16, 1
    %p123 = por %p121, %p122
    %p125 = scmp.ne.s32.totalorder %s110, %s124
    %p126 = scmp.eq.s32.totalorder %s16, 0
    %p127 = por %p125, %p126
    %s128 = ssub.s32 %s17, %s29
    %s129 = ssub.s32 %s18, %s25
    %s130 = sor.u32 %s128, %s129
    %p131 = scmp.eq.s32.totalorder %s130, 0
    %s133 = sadd.s32 %s132, 1
    %s134 = scalar_select %p131, %s132, %s133
    %p137 = pneg %p131
    %p138 = scmp.eq.s32.totalorder %s10, 1
    %p139 = por %p137, %p138
    %p140 = scmp.ne.s32.totalorder %s132, %s135
    %p141 = scmp.eq.s32.totalorder %s10, 0
    %p142 = por %p140, %p141
    %p143 = scmp.ne.s32.totalorder %s132, %s135
    %p144 = scmp.eq.s32.totalorder %s15, 1
    %p145 = por %p143, %p144
    %p146 = scmp.ne.s32.totalorder %s135, %s136
    %p147 = scmp.eq.s32.totalorder %s15, 0
    %p148 = por %p146, %p147
    %p149 = scmp.ne.s32.totalorder %s135, %s136
    %p150 = scmp.eq.s32.totalorder %s16, 1
    %p151 = por %p149, %p150
    %p153 = scmp.ne.s32.totalorder %s136, %s152
    %p154 = scmp.eq.s32.totalorder %s16, 0
    %p155 = por %p153, %p154
    %p156 = scmp.le.s32.totalorder 1, %s10
    %p157 = scmp.lt.s32.totalorder %s10, 3
    %p158 = pnand %p156, %p157
    %p159 = pneg %p158
    // Predicated region
    $region9: #{depthhist_compute_output.1} parent=5 // pred_check
      _
    $region10: #{depthhist_compute_output.1} parent=5 // pred_check_branch
      %161 = sbr.rel (%p158) target = $region12
    $region11: #{depthhist_compute_output.1} parent=5 // pred_region
      %s162 = ssub.s32 %s10, 1
      // Predicated region
      $region13: #{depthhist_compute_output.1} parent=11 // pred_check
        %p163 = pneg %p99
      $region14: #{depthhist_compute_output.1} parent=11 // pred_check_branch
        %165 = sbr.rel (%p163) target = $region16
      $region15: #{depthhist_compute_output.1} parent=11 // pred_region
        _
      $region16: #{depthhist_compute_output.1} parent=11 // pred_fallthru
        _
      // Predicated region
      $region17: #{depthhist_compute_output.1} parent=11 // pred_check
        %p166 = pneg %p120
      $region18: #{depthhist_compute_output.1} parent=11 // pred_check_branch
        %168 = sbr.rel (%p166) target = $region20
      $region19: #{depthhist_compute_output.1} parent=11 // pred_region
        _
      $region20: #{depthhist_compute_output.1} parent=11 // pred_fallthru
        _
    $region12: #{depthhist_compute_output.1} parent=5 // pred_fallthru
      _
    %p169 = scmp.lt.s32.totalorder %s10, 2
    // Predicated region
    $region21: #{depthhist_compute_output.1} parent=5 // pred_check
      %p170 = pneg %p169
    $region22: #{depthhist_compute_output.1} parent=5 // pred_check_branch
      %172 = sbr.rel (%p170) target = $region24
    $region23: #{depthhist_compute_output.1} parent=5 // pred_region
      // Predicated region
      $region25: #{depthhist_compute_output.1} parent=23 // pred_check
        %p173 = pneg %p44
      $region26: #{depthhist_compute_output.1} parent=23 // pred_check_branch
        %175 = sbr.rel (%p173) target = $region28
      $region27: #{depthhist_compute_output.1} parent=23 // pred_region
        %s176 = smul.u32 2, %s18
        %p177 = scmp.lt.s32.totalorder %s17, 1
        %s178 = scalar_select %p177, %s17, 1
        %p179 = scmp.lt.s32.totalorder %s176, 1
        %s180 = scalar_select %p179, %s176, 1
        %s181 = smul.addr %s178, 32
        %s182 = sadd.s32 %s180, %s181
        %s183 = smul.addr %s182, 8
        %s184 = scalar_lea.vmem %s0, %s183
        %s185 = smul.u32 2, %s18
      $region28: #{depthhist_compute_output.1} parent=23 // pred_fallthru
        _
      // Predicated region
      $region29: #{depthhist_compute_output.1} parent=23 // pred_check
        %p186 = pneg %p72
      $region30: #{depthhist_compute_output.1} parent=23 // pred_check_branch
        %188 = sbr.rel (%p186) target = $region32
      $region31: #{depthhist_compute_output.1} parent=23 // pred_region
        %s189 = smul.u32 2, %s18
        %p190 = scmp.lt.s32.totalorder %s17, 1
        %s191 = scalar_select %p190, %s17, 1
        %p192 = scmp.lt.s32.totalorder %s189, 1
        %s193 = scalar_select %p192, %s189, 1
        %s194 = smul.addr %s191, 2
        %s195 = sadd.s32 %s193, %s194
        %s196 = smul.addr %s195, 8
        %s197 = scalar_lea.vmem %s1, %s196
        %s198 = smul.u32 2, %s18
      $region32: #{depthhist_compute_output.1} parent=23 // pred_fallthru
        _
    $region24: #{depthhist_compute_output.1} parent=5 // pred_fallthru
      _
    %p199 = scmp.le.s32.totalorder 1, %s10
    %p200 = scmp.lt.s32.totalorder %s10, 3
    %p201 = pnand %p199, %p200
    %p202 = pneg %p201
    // Predicated region
    $region33: #{depthhist_compute_output.1} parent=5 // pred_check
      _
    $region34: #{depthhist_compute_output.1} parent=5 // pred_check_branch
      %204 = sbr.rel (%p201) target = $region36
    $region35: #{depthhist_compute_output.1} parent=5 // pred_region
      %s205 = ssub.s32 %s10, 1
      %s206 = smul.u32 2, %s20
      %p207 = scmp.lt.s32.totalorder %s19, 1
      %s208 = scalar_select %p207, %s19, 1
      %p209 = scmp.lt.s32.totalorder %s206, 1
      %s210 = scalar_select %p209, %s206, 1
      %s211 = smul.addr %s208, 32
      %s212 = sadd.s32 %s210, %s211
      %s213 = smul.addr %s212, 8
      %s214 = scalar_lea.vmem %s0, %s213
      %p215 = pneg %p50
      %p216 = pneg %p47
      %s217 = smul.u32 2, %s20
      %p218 = scmp.lt.s32.totalorder %s19, 1
      %s219 = scalar_select %p218, %s19, 1
      %p220 = scmp.lt.s32.totalorder %s217, 1
      %s221 = scalar_select %p220, %s217, 1
      %s222 = smul.addr %s219, 2
      %s223 = sadd.s32 %s221, %s222
      %s224 = smul.addr %s223, 8
      %s225 = scalar_lea.vmem %s1, %s224
      %p226 = pneg %p78
      %p227 = pneg %p75
      %p228 = pneg %p99
      %p229 = pneg %p96
      %p230 = pneg %p120
      %p231 = pneg %p117
      %p232 = pneg %p148
      %p233 = pneg %p145
      %s234 = smul.u32 2, %s20
      %p235 = scmp.lt.s32.totalorder %s19, 1
      %s236 = scalar_select %p235, %s19, 1
      %p237 = scmp.lt.s32.totalorder %s234, 1
      %s238 = scalar_select %p237, %s234, 1
      %s239 = smul.addr %s236, 2
      %s240 = sadd.s32 %s238, %s239
      %s241 = scalar_lea.vmem %s4, %s240
      %s242 = smul.u32 2, %s20
      %p243 = scmp.lt.s32.totalorder %s19, 1
      %s244 = scalar_select %p243, %s19, 1
      %p245 = scmp.lt.s32.totalorder %s242, 1
      %s246 = scalar_select %p245, %s242, 1
      %s247 = smul.addr %s244, 32
      %s248 = sadd.s32 %s246, %s247
      %s249 = smul.addr %s248, 8
      %s250 = scalar_lea.vmem %s0, %s249
      %s251 = smul.u32 2, %s20
      %s252 = smul.u32 2, %s20
      %p253 = scmp.lt.s32.totalorder %s19, 1
      %s254 = scalar_select %p253, %s19, 1
      %p255 = scmp.lt.s32.totalorder %s252, 1
      %s256 = scalar_select %p255, %s252, 1
      %s257 = smul.addr %s254, 2
      %s258 = sadd.s32 %s256, %s257
      %s259 = smul.addr %s258, 8
      %s260 = scalar_lea.vmem %s1, %s259
      %s261 = smul.u32 2, %s20
      %s262 = smul.u32 2, %s20
      %p263 = scmp.lt.s32.totalorder %s19, 1
      %s264 = scalar_select %p263, %s19, 1
      %p265 = scmp.lt.s32.totalorder %s262, 1
      %s266 = scalar_select %p265, %s262, 1
      %s267 = smul.addr %s264, 2
      %s268 = sadd.s32 %s266, %s267
      %s269 = scalar_lea.vmem %s4, %s268
      %s270 = smul.u32 2, %s20
      %v271 = vld [vmem:[%s250] sm:$0xff]
      %v272 = vld [vmem:[%s250 + $0x8] sm:$0xff]
      %v273 = vld [vmem:[%s250 + $0x10] sm:$0xff]
      %v274 = vld [vmem:[%s250 + $0x18] sm:$0xff]
      %v275 = vld [vmem:[%s250 + $0x20] sm:$0xff]
      %v276 = vld [vmem:[%s250 + $0x28] sm:$0xff]
      %v277 = vld [vmem:[%s250 + $0x30] sm:$0xff]
      %v278 = vld [vmem:[%s250 + $0x38] sm:$0xff]
      %v279 = vld [vmem:[%s250 + $0x40] sm:$0xff]
      %v280 = vld [vmem:[%s250 + $0x48] sm:$0xff]
      %v281 = vld [vmem:[%s250 + $0x50] sm:$0xff]
      %v282 = vld [vmem:[%s250 + $0x58] sm:$0xff]
      %v283 = vld [vmem:[%s250 + $0x60] sm:$0xff]
      %v284 = vld [vmem:[%s250 + $0x68] sm:$0xff]
      %v285 = vld [vmem:[%s250 + $0x70] sm:$0xff]
      %v286 = vld [vmem:[%s250 + $0x78] sm:$0xff]
      %v287 = vld [vmem:[%s250 + $0x80] sm:$0xff]
      %v288 = vld [vmem:[%s250 + $0x88] sm:$0xff]
      %v289 = vld [vmem:[%s250 + $0x90] sm:$0xff]
      %v290 = vld [vmem:[%s250 + $0x98] sm:$0xff]
      %v291 = vld [vmem:[%s250 + $0xa0] sm:$0xff]
      %v292 = vld [vmem:[%s250 + $0xa8] sm:$0xff]
      %v293 = vld [vmem:[%s250 + $0xb0] sm:$0xff]
      %v294 = vld [vmem:[%s250 + $0xb8] sm:$0xff]
      %v295 = vld [vmem:[%s250 + $0xc0] sm:$0xff]
      %v296 = vld [vmem:[%s250 + $0xc8] sm:$0xff]
      %v297 = vld [vmem:[%s250 + $0xd0] sm:$0xff]
      %v298 = vld [vmem:[%s250 + $0xd8] sm:$0xff]
      %v299 = vld [vmem:[%s250 + $0xe0] sm:$0xff]
      %v300 = vld [vmem:[%s250 + $0xe8] sm:$0xff]
      %v301 = vld [vmem:[%s250 + $0xf0] sm:$0xff]
      %v302 = vld [vmem:[%s250 + $0xf8] sm:$0xff]
      %v303 = vld [vmem:[%s2] sm:$0xff]
      %v304 = vld [vmem:[%s3] sm:$0xff]
      %306 = vset.pattern.permute.xlu0 0
      %307 = vperm.xlu0 %306, %v304
      %v308 = vpop.permute.xlu0 %307
      %310 = vmatpush.msra.mxu0 %v301
      %311 = vmatpush.msra.mxu0 %v299
      %312 = vmatpush.msra.mxu0 %v297
      %313 = vmatpush.msra.mxu0 %v295
      %314 = vmatpush.msra.mxu0 %v293
      %315 = vmatpush.msra.mxu0 %v291
      %316 = vmatpush.msra.mxu0 %v289
      %317 = vmatpush.msra.mxu0 %v287
      %318 = vmatpush.msra.mxu0 %v285
      %319 = vmatpush.msra.mxu0 %v283
      %320 = vmatpush.msra.mxu0 %v281
      %321 = vmatpush.msra.mxu0 %v279
      %322 = vmatpush.msra.mxu0 %v277
      %323 = vmatpush.msra.mxu0 %v275
      %324 = vmatpush.msra.mxu0 %v273
      %325 = vmatpush.msra.mxu0 %v271
      %326 = vmatmul.f32.gmra.mxu0 %v303
      %v327 = vpop.f32.mrf.mxu0
      %v328 = vadd.f32 %v308, %v327
      %329 = vdwg.mxu0
      %330 = vmatpush.msra.mxu0 %v302
      %331 = vmatpush.msra.mxu0 %v300
      %332 = vmatpush.msra.mxu0 %v298
      %333 = vmatpush.msra.mxu0 %v296
      %334 = vmatpush.msra.mxu0 %v294
      %335 = vmatpush.msra.mxu0 %v292
      %336 = vmatpush.msra.mxu0 %v290
      %337 = vmatpush.msra.mxu0 %v288
      %338 = vmatpush.msra.mxu0 %v286
      %339 = vmatpush.msra.mxu0 %v284
      %340 = vmatpush.msra.mxu0 %v282
      %341 = vmatpush.msra.mxu0 %v280
      %342 = vmatpush.msra.mxu0 %v278
      %343 = vmatpush.msra.mxu0 %v276
      %344 = vmatpush.msra.mxu0 %v274
      %345 = vmatpush.msra.mxu0 %v272
      %346 = vmatmul.f32.gmra.mxu0 %v303
      %v347 = vpop.f32.mrf.mxu0
      %v348 = vadd.f32 %v308, %v347
      %349 = vdwg.mxu0
      %v350 = vmax.f32 %v328, 0.0
      %v351 = vmax.f32 %v348, 0.0
      %v352 = vld [vmem:[%s260] sm:$0xff]
      %v353 = vld [vmem:[%s260 + $0x8] sm:$0xff]
      %v354 = vmul.f32 %v350, %v352
      %v355 = vmul.f32 %v351, %v353
      %v356 = vrot.slane %v354, 4
      %v357 = vadd.f32 %v354, %v356
      %v358 = vrot.slane %v357, 2
      %v359 = vadd.f32 %v357, %v358
      %v360 = vrot.slane %v359, 1
      %v361 = vadd.f32 %v359, %v360
      %v362 = vrot.slane %v355, 4
      %v363 = vadd.f32 %v355, %v362
      %v364 = vrot.slane %v363, 2
      %v365 = vadd.f32 %v363, %v364
      %v366 = vrot.slane %v365, 1
      %v367 = vadd.f32 %v365, %v366
      %v370 = vrot.slane %v367, 7
      %vm371 = vcmask 1040384
      %v372 = vsel %vm371, %v361, %v370
      %v374 = vlaneseq
      %vm375 = vcmp.ge.s32.totalorder %v374, 0
      %vm376 = vcmp.lt.s32.totalorder %v374, 256
      %vm377 = vmand %vm375, %vm376
      %378 = vst.msk [vmem:[%s269] sm:$0x3] %vm377, %v372
      %s379 = smul.u32 2, %s20
      %p380 = scmp.lt.s32.totalorder %s19, 1
      %s381 = scalar_select %p380, %s19, 1
      %p382 = scmp.lt.s32.totalorder %s379, 1
      %s383 = scalar_select %p382, %s379, 1
      %s384 = smul.addr %s381, 2
      %s385 = sadd.s32 %s383, %s384
      %s386 = scalar_lea.vmem %s4, %s385
      // Predicated region
      $region37: #{depthhist_compute_output.1} parent=35 // pred_check
        %p387 = pneg %p145
      $region38: #{depthhist_compute_output.1} parent=35 // pred_check_branch
        %389 = sbr.rel (%p387) target = $region40
      $region39: #{depthhist_compute_output.1} parent=35 // pred_region
        %s390 = smul.u32 2, %s20
      $region40: #{depthhist_compute_output.1} parent=35 // pred_fallthru
        _
    $region36: #{depthhist_compute_output.1} parent=5 // pred_fallthru
      _
    %p391 = scmp.le.s32.totalorder 2, %s10
    // Predicated region
    $region41: #{depthhist_compute_output.1} parent=5 // pred_check
      %p392 = pneg %p391
    $region42: #{depthhist_compute_output.1} parent=5 // pred_check_branch
      %394 = sbr.rel (%p392) target = $region44
    $region43: #{depthhist_compute_output.1} parent=5 // pred_region
      %s395 = ssub.s32 %s10, 2
      // Predicated region
      $region45: #{depthhist_compute_output.1} parent=43 // pred_check
        %p396 = pneg %p151
      $region46: #{depthhist_compute_output.1} parent=43 // pred_check_branch
        %398 = sbr.rel (%p396) target = $region48
      $region47: #{depthhist_compute_output.1} parent=43 // pred_region
        %s399 = smul.u32 2, %s22
        %p400 = scmp.lt.s32.totalorder %s21, 1
        %s401 = scalar_select %p400, %s21, 1
        %p402 = scmp.lt.s32.totalorder %s399, 1
        %s403 = scalar_select %p402, %s399, 1
        %s404 = smul.addr %s401, 2
        %s405 = sadd.s32 %s403, %s404
        %s406 = scalar_lea.vmem %s4, %s405
      $region48: #{depthhist_compute_output.1} parent=43 // pred_fallthru
        _
    $region44: #{depthhist_compute_output.1} parent=5 // pred_fallthru
      _
  $region6: #{depthhist_compute_output.1} parent=0 // loop_footer
    %s14 = sadd.s32 1, %s10
  $region7: #{depthhist_compute_output.1} parent=0 // loop_footer_branch
    %9 = sbr.rel target = $region3
  $region8: #{depthhist_compute_output.1} parent=0 // loop_exit
    _

</llo_original>
